<compile_context>
chip_gen: v7x
topology: tpu7x:2x2x1
jax: 0.10.0
libtpu: 0.0.40
codegen_flags: <defaults>
</compile_context>

<pallas_src>
import functools

import jax
import jax.numpy as jnp
from jax.experimental import pallas as pl
from jax.experimental.pallas import tpu as pltpu

LANES = 128
SUBLANES = 8
MAX_TILE_ROWS = 2048   # (2048, 128) f32 block = 1 MiB per input
NUM_SLICES = 2         # v7x has 2 TensorCores; extra axis is ~free on v5e/v6e


def _bce_dice_kernel(x_ref, t_ref, bce_ref, inter_ref, total_ref, *,
                     tiles_per_slice, num_tiles, tile_rows, valid_rows,
                     need_row_mask):
    c = pl.program_id(0)   # TensorCore slice ("parallel")
    i = pl.program_id(1)   # row-tile within the slice ("arbitrary" reduction)

    @pl.when(i == 0)
    def _init():
        bce_ref[...] = jnp.zeros_like(bce_ref)
        inter_ref[...] = jnp.zeros_like(inter_ref)
        total_ref[...] = jnp.zeros_like(total_ref)

    tile_idx = c * tiles_per_slice + i

    @pl.when(tile_idx < num_tiles)
    def _accumulate():
        x = x_ref[...].astype(jnp.float32)
        t = t_ref[...].astype(jnp.float32)

        # Numerically stable BCE-with-logits: max(x,0) - x*t + log(1+exp(-|x|))
        e = jnp.exp(-jnp.abs(x))                      # 1 EUP exp, reused below
        one_plus_e = 1.0 + e
        bce_elem = jnp.maximum(x, 0.0) - x * t + jnp.log(one_plus_e)

        # sigmoid(x) from the same e:  x>=0 -> 1/(1+e),  x<0 -> e/(1+e)
        # (exact reciprocal keeps the loss bit-close to the reference; the
        #  kernel is HBM-bound at this tile size, approx=True would also work)
        r = pl.reciprocal(one_plus_e, approx=False)
        sig = jnp.where(x >= 0.0, r, e * r)

        inter_elem = sig * t
        total_elem = sig + t

        if need_row_mask:
            # Only compiled in when the last tile is ragged: drop garbage rows
            # beyond the logical array (use where, not multiply, vs NaN/Inf).
            row = jax.lax.broadcasted_iota(jnp.int32, x.shape, 0)
            valid = (tile_idx * tile_rows + row) < valid_rows
            bce_elem = jnp.where(valid, bce_elem, 0.0)
            inter_elem = jnp.where(valid, inter_elem, 0.0)
            total_elem = jnp.where(valid, total_elem, 0.0)

        def fold(v):
            # (tile_rows, 128) -> (8, 128) via cross-vreg VPU adds (no XLU).
            return jnp.sum(v.reshape(tile_rows // SUBLANES, SUBLANES, LANES),
                           axis=0)

        bce_ref[0] += fold(bce_elem)
        inter_ref[0] += fold(inter_elem)
        total_ref[0] += fold(total_elem)


def _reduce_sums(x_flat, t_flat):
    n = x_flat.shape[0]
    vreg_elems = SUBLANES * LANES
    n_pad = ((n + vreg_elems - 1) // vreg_elems) * vreg_elems
    pad = n_pad - n
    if pad:
        # Tiny (<1024 elems) zero pad only when n is not vreg-aligned; its
        # exact contribution is removed analytically below (no in-kernel mask).
        x_flat = jnp.pad(x_flat, (0, pad))
        t_flat = jnp.pad(t_flat, (0, pad))

    rows = n_pad // LANES
    x2d = x_flat.reshape(rows, LANES)
    t2d = t_flat.reshape(rows, LANES)

    tile_rows = min(MAX_TILE_ROWS, rows)          # multiple of 8 by construction
    num_tiles = pl.cdiv(rows, tile_rows)
    tiles_per_slice = pl.cdiv(num_tiles, NUM_SLICES)
    need_row_mask = (rows % tile_rows) != 0

    kernel = functools.partial(
        _bce_dice_kernel,
        tiles_per_slice=tiles_per_slice, num_tiles=num_tiles,
        tile_rows=tile_rows, valid_rows=rows, need_row_mask=need_row_mask)

    def in_map(c, i):
        # Clamp so the ragged slice split never issues an OOB DMA; clamped
        # (duplicate) tiles are gated off inside the kernel with pl.when.
        return (jnp.minimum(c * tiles_per_slice + i, num_tiles - 1), 0)

    acc_shape = jax.ShapeDtypeStruct((NUM_SLICES, SUBLANES, LANES), jnp.float32)
    acc_spec = pl.BlockSpec((1, SUBLANES, LANES), lambda c, i: (c, 0, 0))

    in_bytes = (x2d.size * x2d.dtype.itemsize + t2d.size * t2d.dtype.itemsize)
    cost = pl.CostEstimate(
        flops=12 * n_pad,
        transcendentals=3 * n_pad,
        bytes_accessed=in_bytes + 3 * NUM_SLICES * SUBLANES * LANES * 4)

    bce_acc, inter_acc, total_acc = pl.pallas_call(
        kernel,
        out_shape=(acc_shape, acc_shape, acc_shape),
        grid_spec=pltpu.PrefetchScalarGridSpec(
            num_scalar_prefetch=0,
            grid=(NUM_SLICES, tiles_per_slice),
            in_specs=[pl.BlockSpec((tile_rows, LANES), in_map),
                      pl.BlockSpec((tile_rows, LANES), in_map)],
            out_specs=(acc_spec, acc_spec, acc_spec),
        ),
        compiler_params=pltpu.CompilerParams(
            dimension_semantics=("parallel", "arbitrary")),
        cost_estimate=cost,
    )(x2d, t2d)

    bce_sum = jnp.sum(bce_acc)
    inter_sum = jnp.sum(inter_acc)
    total_sum = jnp.sum(total_acc)

    if pad:
        # Zero logit / zero target pad elements contribute exactly:
        #   bce: log(2) each, inter: 0, total: sigmoid(0) = 0.5 each.
        p = jnp.float32(pad)
        bce_sum = bce_sum - p * jnp.log(jnp.float32(2.0))
        total_sum = total_sum - 0.5 * p

    return bce_sum, inter_sum, total_sum


def bce_dice_loss(logits, target, alpha, beta, smooth=1e-6):
    """alpha * BCEWithLogits(mean) + beta * (1 - (2*inter + s)/(total + s))."""
    x_flat = logits.reshape(-1)
    t_flat = target.reshape(-1)
    if not jnp.issubdtype(x_flat.dtype, jnp.floating):
        x_flat = x_flat.astype(jnp.float32)
    if not jnp.issubdtype(t_flat.dtype, jnp.floating):
        t_flat = t_flat.astype(jnp.float32)
    n = x_flat.shape[0]

    bce_sum, inter_sum, total_sum = _reduce_sums(x_flat, t_flat)

    bce = bce_sum / jnp.float32(n)                # reduction='mean'
    dice = 1.0 - (2.0 * inter_sum + smooth) / (total_sum + smooth)
    return alpha * bce + beta * dice


if __name__ == "__main__":
    # Deterministic "parameters" of the module (alpha, beta are ctor args).
    alpha = 0.5
    beta = 0.5
    smooth = 1e-6

    key = jax.random.PRNGKey(0)
    k1, k2 = jax.random.split(key)
    # NCHW-shaped logits and binary targets, as a segmentation loss would see.
    x = jax.random.normal(k1, (2, 4, 16, 16), dtype=jnp.float32)
    t = (jax.random.uniform(k2, (2, 4, 16, 16)) > 0.5).astype(jnp.float32)

    loss = bce_dice_loss(x, t, alpha, beta, smooth)
    jax.block_until_ready(loss)

    # Pure-JAX reference check.
    xf = x.reshape(-1)
    tf = t.reshape(-1)
    bce_ref = jnp.mean(jnp.maximum(xf, 0.0) - xf * tf +
                       jnp.log1p(jnp.exp(-jnp.abs(xf))))
    sig = jax.nn.sigmoid(xf)
    dice_ref = 1.0 - (2.0 * jnp.sum(sig * tf) + smooth) / (jnp.sum(sig + tf) + smooth)
    ref = alpha * bce_ref + beta * dice_ref
    assert jnp.allclose(loss, ref, rtol=1e-5, atol=1e-5), (loss, ref)

    print("KERNEL_OK")
</pallas_src>

<mosaic_0001>
module attributes {stable_mosaic.version = 11 : i64} {
  func.func @_bce_dice_kernel(%arg0: i32, %arg1: i32, %arg2: memref<16x128xf32, #tpu.memory_space<vmem>>, %arg3: memref<16x128xf32, #tpu.memory_space<vmem>>, %arg4: memref<1x8x128xf32, #tpu.memory_space<vmem>>, %arg5: memref<1x8x128xf32, #tpu.memory_space<vmem>>, %arg6: memref<1x8x128xf32, #tpu.memory_space<vmem>>) attributes {dimension_semantics = [#tpu.dimension_semantics<parallel>, #tpu.dimension_semantics<arbitrary>], iteration_bounds = array<i64: 2, 1>, scalar_prefetch = 0 : i64, scratch_operands = 0 : i64, tpu.core_type = #tpu.core_type<tc>, window_params = [{transform_indices = @transform_0, window_bounds = array<i64: 16, 128>}, {transform_indices = @transform_1, window_bounds = array<i64: 16, 128>}, {transform_indices = @transform_2, window_bounds = array<i64: 1, 8, 128>}, {transform_indices = @transform_3, window_bounds = array<i64: 1, 8, 128>}, {transform_indices = @transform_4, window_bounds = array<i64: 1, 8, 128>}]} {
    %c0_i32 = arith.constant 0 : i32
    %0 = arith.cmpi eq, %arg1, %c0_i32 : i32
    %1 = arith.extui %0 : i1 to i32
    %c0_i32_0 = arith.constant 0 : i32
    %2 = arith.cmpi ne, %1, %c0_i32_0 : i32
    scf.if %2 {
      %cst = arith.constant 0.000000e+00 : f32
      %8 = vector.broadcast %cst : f32 to vector<1x8x128xf32>
      %c0 = arith.constant 0 : index
      %c0_3 = arith.constant 0 : index
      %c0_4 = arith.constant 0 : index
      %9 = vector.load %arg4[%c0, %c0_3, %c0_4] : memref<1x8x128xf32, #tpu.memory_space<vmem>>, vector<1x8x128xf32>
      tpu.vector_store %arg4[%c0, %c0_3, %c0_4], %8 {strides = array<i32>} : memref<1x8x128xf32, #tpu.memory_space<vmem>>, vector<1x8x128xf32>,
      %cst_5 = arith.constant 0.000000e+00 : f32
      %10 = vector.broadcast %cst_5 : f32 to vector<1x8x128xf32>
      %c0_6 = arith.constant 0 : index
      %c0_7 = arith.constant 0 : index
      %c0_8 = arith.constant 0 : index
      %11 = vector.load %arg5[%c0_6, %c0_7, %c0_8] : memref<1x8x128xf32, #tpu.memory_space<vmem>>, vector<1x8x128xf32>
      tpu.vector_store %arg5[%c0_6, %c0_7, %c0_8], %10 {strides = array<i32>} : memref<1x8x128xf32, #tpu.memory_space<vmem>>, vector<1x8x128xf32>,
      %cst_9 = arith.constant 0.000000e+00 : f32
      %12 = vector.broadcast %cst_9 : f32 to vector<1x8x128xf32>
      %c0_10 = arith.constant 0 : index
      %c0_11 = arith.constant 0 : index
      %c0_12 = arith.constant 0 : index
      %13 = vector.load %arg6[%c0_10, %c0_11, %c0_12] : memref<1x8x128xf32, #tpu.memory_space<vmem>>, vector<1x8x128xf32>
      tpu.vector_store %arg6[%c0_10, %c0_11, %c0_12], %12 {strides = array<i32>} : memref<1x8x128xf32, #tpu.memory_space<vmem>>, vector<1x8x128xf32>,
    } else {
    }
    %c1_i32 = arith.constant 1 : i32
    %3 = arith.muli %arg0, %c1_i32 : i32
    %4 = arith.addi %3, %arg1 : i32
    %c1_i32_1 = arith.constant 1 : i32
    %5 = arith.cmpi slt, %4, %c1_i32_1 : i32
    %6 = arith.extui %5 : i1 to i32
    %c0_i32_2 = arith.constant 0 : i32
    %7 = arith.cmpi ne, %6, %c0_i32_2 : i32
    scf.if %7 {
      %c0 = arith.constant 0 : index
      %c0_3 = arith.constant 0 : index
      %8 = vector.load %arg2[%c0, %c0_3] : memref<16x128xf32, #tpu.memory_space<vmem>>, vector<16x128xf32>
      %c0_4 = arith.constant 0 : index
      %c0_5 = arith.constant 0 : index
      %9 = vector.load %arg3[%c0_4, %c0_5] : memref<16x128xf32, #tpu.memory_space<vmem>>, vector<16x128xf32>
      %10 = math.absf %8 : vector<16x128xf32>
      %cst = arith.constant 0.000000e+00 : f32
      %11 = vector.broadcast %cst : f32 to vector<16x128xf32>
      %12 = arith.subf %11, %10 : vector<16x128xf32>
      %13 = math.exp %12 : vector<16x128xf32>
      %cst_6 = arith.constant 1.000000e+00 : f32
      %14 = vector.broadcast %cst_6 : f32 to vector<16x128xf32>
      %15 = arith.addf %14, %13 : vector<16x128xf32>
      %cst_7 = arith.constant 0.000000e+00 : f32
      %16 = vector.broadcast %cst_7 : f32 to vector<16x128xf32>
      %17 = arith.maximumf %8, %16 : vector<16x128xf32>
      %18 = arith.mulf %8, %9 : vector<16x128xf32>
      %19 = arith.subf %17, %18 : vector<16x128xf32>
      %20 = math.log %15 : vector<16x128xf32>
      %21 = arith.addf %19, %20 : vector<16x128xf32>
      %22 = tpu.reciprocal %15 : vector<16x128xf32> -> vector<16x128xf32>
      %cst_8 = arith.constant 0.000000e+00 : f32
      %23 = vector.broadcast %cst_8 : f32 to vector<16x128xf32>
      %24 = arith.cmpf oge, %8, %23 : vector<16x128xf32>
      %25 = arith.mulf %13, %22 : vector<16x128xf32>
      %26 = arith.select %24, %22, %25 : vector<16x128xi1>, vector<16x128xf32>
      %27 = arith.mulf %26, %9 : vector<16x128xf32>
      %28 = arith.addf %26, %9 : vector<16x128xf32>
      %c0_9 = arith.constant 0 : index
      %c0_10 = arith.constant 0 : index
      %c0_11 = arith.constant 0 : index
      %29 = vector.load %arg4[%c0_9, %c0_10, %c0_11] : memref<1x8x128xf32, #tpu.memory_space<vmem>>, vector<1x8x128xf32>
      %30 = vector.shape_cast %29 : vector<1x8x128xf32> to vector<8x128xf32>
      %31 = vector.shape_cast %21 : vector<16x128xf32> to vector<2x8x128xf32>
      %cst_12 = arith.constant dense<0.000000e+00> : vector<8x128xf32>
      %32 = vector.multi_reduction <add>, %31, %cst_12 [0] : vector<2x8x128xf32> to vector<8x128xf32>
      %33 = arith.addf %30, %32 : vector<8x128xf32>
      %c0_13 = arith.constant 0 : index
      %c0_14 = arith.constant 0 : index
      %c0_15 = arith.constant 0 : index
      %34 = vector.load %arg4[%c0_13, %c0_14, %c0_15] : memref<1x8x128xf32, #tpu.memory_space<vmem>>, vector<1x8x128xf32>
      %35 = vector.shape_cast %34 : vector<1x8x128xf32> to vector<8x128xf32>
      %36 = vector.shape_cast %33 : vector<8x128xf32> to vector<1x8x128xf32>
      tpu.vector_store %arg4[%c0_13, %c0_14, %c0_15], %36 {strides = array<i32>} : memref<1x8x128xf32, #tpu.memory_space<vmem>>, vector<1x8x128xf32>,
      %c0_16 = arith.constant 0 : index
      %c0_17 = arith.constant 0 : index
      %c0_18 = arith.constant 0 : index
      %37 = vector.load %arg5[%c0_16, %c0_17, %c0_18] : memref<1x8x128xf32, #tpu.memory_space<vmem>>, vector<1x8x128xf32>
      %38 = vector.shape_cast %37 : vector<1x8x128xf32> to vector<8x128xf32>
      %39 = vector.shape_cast %27 : vector<16x128xf32> to vector<2x8x128xf32>
      %cst_19 = arith.constant dense<0.000000e+00> : vector<8x128xf32>
      %40 = vector.multi_reduction <add>, %39, %cst_19 [0] : vector<2x8x128xf32> to vector<8x128xf32>
      %41 = arith.addf %38, %40 : vector<8x128xf32>
      %c0_20 = arith.constant 0 : index
      %c0_21 = arith.constant 0 : index
      %c0_22 = arith.constant 0 : index
      %42 = vector.load %arg5[%c0_20, %c0_21, %c0_22] : memref<1x8x128xf32, #tpu.memory_space<vmem>>, vector<1x8x128xf32>
      %43 = vector.shape_cast %42 : vector<1x8x128xf32> to vector<8x128xf32>
      %44 = vector.shape_cast %41 : vector<8x128xf32> to vector<1x8x128xf32>
      tpu.vector_store %arg5[%c0_20, %c0_21, %c0_22], %44 {strides = array<i32>} : memref<1x8x128xf32, #tpu.memory_space<vmem>>, vector<1x8x128xf32>,
      %c0_23 = arith.constant 0 : index
      %c0_24 = arith.constant 0 : index
      %c0_25 = arith.constant 0 : index
      %45 = vector.load %arg6[%c0_23, %c0_24, %c0_25] : memref<1x8x128xf32, #tpu.memory_space<vmem>>, vector<1x8x128xf32>
      %46 = vector.shape_cast %45 : vector<1x8x128xf32> to vector<8x128xf32>
      %47 = vector.shape_cast %28 : vector<16x128xf32> to vector<2x8x128xf32>
      %cst_26 = arith.constant dense<0.000000e+00> : vector<8x128xf32>
      %48 = vector.multi_reduction <add>, %47, %cst_26 [0] : vector<2x8x128xf32> to vector<8x128xf32>
      %49 = arith.addf %46, %48 : vector<8x128xf32>
      %c0_27 = arith.constant 0 : index
      %c0_28 = arith.constant 0 : index
      %c0_29 = arith.constant 0 : index
      %50 = vector.load %arg6[%c0_27, %c0_28, %c0_29] : memref<1x8x128xf32, #tpu.memory_space<vmem>>, vector<1x8x128xf32>
      %51 = vector.shape_cast %50 : vector<1x8x128xf32> to vector<8x128xf32>
      %52 = vector.shape_cast %49 : vector<8x128xf32> to vector<1x8x128xf32>
      tpu.vector_store %arg6[%c0_27, %c0_28, %c0_29], %52 {strides = array<i32>} : memref<1x8x128xf32, #tpu.memory_space<vmem>>, vector<1x8x128xf32>,
    } else {
    }
    return
  }
  func.func @transform_0(%arg0: i32, %arg1: i32) -> (i32, i32) {
    %c1_i32 = arith.constant 1 : i32
    %0 = arith.muli %arg0, %c1_i32 : i32
    %1 = arith.addi %0, %arg1 : i32
    %c0_i32 = arith.constant 0 : i32
    %2 = arith.minsi %1, %c0_i32 : i32
    %c0_i32_0 = arith.constant 0 : i32
    %c0_i32_1 = arith.constant 0 : i32
    return %2, %c0_i32_0 : i32, i32
  }
  func.func @transform_1(%arg0: i32, %arg1: i32) -> (i32, i32) {
    %c1_i32 = arith.constant 1 : i32
    %0 = arith.muli %arg0, %c1_i32 : i32
    %1 = arith.addi %0, %arg1 : i32
    %c0_i32 = arith.constant 0 : i32
    %2 = arith.minsi %1, %c0_i32 : i32
    %c0_i32_0 = arith.constant 0 : i32
    %c0_i32_1 = arith.constant 0 : i32
    return %2, %c0_i32_0 : i32, i32
  }
  func.func @transform_2(%arg0: i32, %arg1: i32) -> (i32, i32, i32) {
    %c0_i32 = arith.constant 0 : i32
    %c0_i32_0 = arith.constant 0 : i32
    %c0_i32_1 = arith.constant 0 : i32
    return %arg0, %c0_i32, %c0_i32_0 : i32, i32, i32
  }
  func.func @transform_3(%arg0: i32, %arg1: i32) -> (i32, i32, i32) {
    %c0_i32 = arith.constant 0 : i32
    %c0_i32_0 = arith.constant 0 : i32
    %c0_i32_1 = arith.constant 0 : i32
    return %arg0, %c0_i32, %c0_i32_0 : i32, i32, i32
  }
  func.func @transform_4(%arg0: i32, %arg1: i32) -> (i32, i32, i32) {
    %c0_i32 = arith.constant 0 : i32
    %c0_i32_0 = arith.constant 0 : i32
    %c0_i32_1 = arith.constant 0 : i32
    return %arg0, %c0_i32, %c0_i32_0 : i32, i32, i32
  }
}

</mosaic_0001>

<llo_original>
// kernel: tpu_custom_call.1
$region0: #{tpu_custom_call.1}
  #allocation0 [shape = 'u32[]', space=smem, size = 0x4, offset = 0x4, fixed_abs, tag = 'smem constant byte address 0x4 - core index']
  #allocation1 [shape = 'u32[144,128]{1,0:T(1,128)}', space=vmem, size = 0x12000, scoped, tag = 'internal scratch']
  %s0 = inlined_call_operand.hbm [shape: f32[16,128], index: 0, kind: input, shape index: {}]
  %s1 = inlined_call_operand.hbm [shape: f32[16,128], index: 1, kind: input, shape index: {}]
  %s2 = inlined_call_operand.hbm [shape: f32[2,8,128], index: 2, kind: output, shape index: {0}]
  %s3 = inlined_call_operand.hbm [shape: f32[2,8,128], index: 3, kind: output, shape index: {1}]
  %s4 = inlined_call_operand.hbm [shape: f32[2,8,128], index: 4, kind: output, shape index: {2}]
  %5 = xla_tuple %s2, %s3, %s4
  %s6 = sld [smem:[#allocation0]]
  $region73: #{tpu_custom_call.1} parent=0
    _
  %s8 = ssub.s32 1, %s6
  %s9 = scalar_select 0, %s8, %s6
  $region1: #{tpu_custom_call.1} parent=0
    #allocation2 [shape = 'u8[16384]{0}', space=vmem, size = 0x4000, scoped, tag = 'input window, operand 0']
    #allocation3 [shape = 's32[2]{0}', space=sflag, size = 0x8, scoped, tag = 'scoped memory for tpu_custom_call.1']
    #allocation4 [shape = 's32[2]{0}', space=sflag, size = 0x8, scoped, tag = 'scoped memory for tpu_custom_call.1']
    #allocation5 [shape = 'u8[16384]{0}', space=vmem, size = 0x4000, scoped, tag = 'input window, operand 1']
    #allocation6 [shape = 's32[2]{0}', space=sflag, size = 0x8, scoped, tag = 'scoped memory for tpu_custom_call.1']
    #allocation7 [shape = 'u8[8192]{0}', space=vmem, size = 0x2000, scoped, tag = 'output window, operand 0']
    #allocation8 [shape = 'u8[8192]{0}', space=vmem, size = 0x2000, scoped, tag = 'output window, operand 1']
    #allocation9 [shape = 's32[2]{0}', space=sflag, size = 0x8, scoped, tag = 'scoped memory for tpu_custom_call.1']
    #allocation10 [shape = 'u8[8192]{0}', space=vmem, size = 0x2000, scoped, tag = 'output window, operand 2']
    %10 = vsyncpa [#allocation3], 0
    %s11 = scalar_lea.sflag [#allocation3], 1
    %12 = vsyncpa %s11, 0
    %13 = vsyncpa [#allocation6], 0
    %s14 = scalar_lea.sflag [#allocation6], 1
    %15 = vsyncpa %s14, 0
    %16 = vsyncpa [#allocation4], 0
    %s17 = scalar_lea.sflag [#allocation4], 1
    %18 = vsyncpa %s17, 0
    %19 = vsyncpa [#allocation9], 0
    %s20 = scalar_lea.sflag [#allocation9], 1
    %21 = vsyncpa %s20, 0
    loop: start=0, step=1, limit=4
    $region2: #{tpu_custom_call.1} parent=1 // loop_pre_header
      _
    $region3: #{tpu_custom_call.1} parent=1 // loop_header
      %s23 = sphi 0, %s27
      %p24 = scmp.ge.s32.totalorder %s23, 4
      %s30 = sphi 0, %s42
      %s31 = sphi 0, %s38
      %s32 = sphi 0, %s30
      %s33 = sphi 0, %s31
      %s34 = sphi 0, %s32
      %s35 = sphi 0, %s33
      %s51 = sphi 0, %s53
      %s54 = sphi 0, %s51
      %s55 = sphi 0, %s54
      %s71 = sphi 0, %s55
      %s83 = sphi 0, %s85
      %s86 = sphi 0, %s83
      %s87 = sphi 0, %s86
      %s103 = sphi 0, %s87
      %s109 = sphi 0, %s111
      %s112 = sphi 0, %s109
      %s113 = sphi 0, %s112
      %s129 = sphi 0, %s113
      %s135 = sphi 0, %s137
      %s138 = sphi 0, %s135
      %s139 = sphi 0, %s138
      %s155 = sphi 0, %s139
      %s161 = sphi 0, %s163
      %s164 = sphi 0, %s161
      %s165 = sphi 0, %s164
      %s181 = sphi 0, %s165
    $region4: #{tpu_custom_call.1} parent=1 // loop_header_branch
      %26 = sbr.rel (%p24) target = $region8
    $region5: #{tpu_custom_call.1} parent=1 // loop_body
      %s28 = ssub.s32 %s23, 1
      %s29 = ssub.s32 %s23, 2
      %s36 = sadd.s32 1, %s31
      %p37 = scmp.ge.s32.totalorder %s36, 1
      %s38 = scalar_select %p37, 0, %s36
      %s39 = sadd.s32 1, %s30
      %s40 = scalar_select %p37, %s39, %s30
      %p41 = scmp.ge.s32.totalorder %s40, 2
      %s42 = scalar_select %p41, 0, %s40
      %s43 = sadd.s32 %s30, %s31
      %p44 = scmp.lt.s32.totalorder %s43, 0
      %s45 = scalar_select %p44, %s43, 0
      %s46 = sadd.s32 %s42, %s38
      %p47 = scmp.lt.s32.totalorder %s46, 0
      %s48 = scalar_select %p47, %s46, 0
      %s49 = ssub.s32 %s45, %s48
      %p50 = scmp.eq.s32.totalorder %s49, 0
      %s52 = sadd.s32 %s51, 1
      %s53 = scalar_select %p50, %s51, %s52
      %p56 = pneg %p50
      %p57 = scmp.eq.s32.totalorder %s23, 1
      %p58 = por %p56, %p57
      %p59 = scmp.ne.s32.totalorder %s51, %s54
      %p60 = scmp.eq.s32.totalorder %s23, 0
      %p61 = por %p59, %p60
      %p62 = scmp.ne.s32.totalorder %s51, %s54
      %p63 = scmp.eq.s32.totalorder %s28, 1
      %p64 = por %p62, %p63
      %p65 = scmp.ne.s32.totalorder %s54, %s55
      %p66 = scmp.eq.s32.totalorder %s28, 0
      %p67 = por %p65, %p66
      %p68 = scmp.ne.s32.totalorder %s54, %s55
      %p69 = scmp.eq.s32.totalorder %s29, 1
      %p70 = por %p68, %p69
      %p72 = scmp.ne.s32.totalorder %s55, %s71
      %p73 = scmp.eq.s32.totalorder %s29, 0
      %p74 = por %p72, %p73
      %s75 = sadd.s32 %s30, %s31
      %p76 = scmp.lt.s32.totalorder %s75, 0
      %s77 = scalar_select %p76, %s75, 0
      %s78 = sadd.s32 %s42, %s38
      %p79 = scmp.lt.s32.totalorder %s78, 0
      %s80 = scalar_select %p79, %s78, 0
      %s81 = ssub.s32 %s77, %s80
      %p82 = scmp.eq.s32.totalorder %s81, 0
      %s84 = sadd.s32 %s83, 1
      %s85 = scalar_select %p82, %s83, %s84
      %p88 = pneg %p82
      %p89 = scmp.eq.s32.totalorder %s23, 1
      %p90 = por %p88, %p89
      %p91 = scmp.ne.s32.totalorder %s83, %s86
      %p92 = scmp.eq.s32.totalorder %s23, 0
      %p93 = por %p91, %p92
      %p94 = scmp.ne.s32.totalorder %s83, %s86
      %p95 = scmp.eq.s32.totalorder %s28, 1
      %p96 = por %p94, %p95
      %p97 = scmp.ne.s32.totalorder %s86, %s87
      %p98 = scmp.eq.s32.totalorder %s28, 0
      %p99 = por %p97, %p98
      %p100 = scmp.ne.s32.totalorder %s86, %s87
      %p101 = scmp.eq.s32.totalorder %s29, 1
      %p102 = por %p100, %p101
      %p104 = scmp.ne.s32.totalorder %s87, %s103
      %p105 = scmp.eq.s32.totalorder %s29, 0
      %p106 = por %p104, %p105
      %s107 = ssub.s32 %s30, %s42
      %p108 = scmp.eq.s32.totalorder %s107, 0
      %s110 = sadd.s32 %s109, 1
      %s111 = scalar_select %p108, %s109, %s110
      %p114 = pneg %p108
      %p115 = scmp.eq.s32.totalorder %s23, 1
      %p116 = por %p114, %p115
      %p117 = scmp.ne.s32.totalorder %s109, %s112
      %p118 = scmp.eq.s32.totalorder %s23, 0
      %p119 = por %p117, %p118
      %p120 = scmp.ne.s32.totalorder %s109, %s112
      %p121 = scmp.eq.s32.totalorder %s28, 1
      %p122 = por %p120, %p121
      %p123 = scmp.ne.s32.totalorder %s112, %s113
      %p124 = scmp.eq.s32.totalorder %s28, 0
      %p125 = por %p123, %p124
      %p126 = scmp.ne.s32.totalorder %s112, %s113
      %p127 = scmp.eq.s32.totalorder %s29, 1
      %p128 = por %p126, %p127
      %p130 = scmp.ne.s32.totalorder %s113, %s129
      %p131 = scmp.eq.s32.totalorder %s29, 0
      %p132 = por %p130, %p131
      %s133 = ssub.s32 %s30, %s42
      %p134 = scmp.eq.s32.totalorder %s133, 0
      %s136 = sadd.s32 %s135, 1
      %s137 = scalar_select %p134, %s135, %s136
      %p140 = pneg %p134
      %p141 = scmp.eq.s32.totalorder %s23, 1
      %p142 = por %p140, %p141
      %p143 = scmp.ne.s32.totalorder %s135, %s138
      %p144 = scmp.eq.s32.totalorder %s23, 0
      %p145 = por %p143, %p144
      %p146 = scmp.ne.s32.totalorder %s135, %s138
      %p147 = scmp.eq.s32.totalorder %s28, 1
      %p148 = por %p146, %p147
      %p149 = scmp.ne.s32.totalorder %s138, %s139
      %p150 = scmp.eq.s32.totalorder %s28, 0
      %p151 = por %p149, %p150
      %p152 = scmp.ne.s32.totalorder %s138, %s139
      %p153 = scmp.eq.s32.totalorder %s29, 1
      %p154 = por %p152, %p153
      %p156 = scmp.ne.s32.totalorder %s139, %s155
      %p157 = scmp.eq.s32.totalorder %s29, 0
      %p158 = por %p156, %p157
      %s159 = ssub.s32 %s30, %s42
      %p160 = scmp.eq.s32.totalorder %s159, 0
      %s162 = sadd.s32 %s161, 1
      %s163 = scalar_select %p160, %s161, %s162
      %p166 = pneg %p160
      %p167 = scmp.eq.s32.totalorder %s23, 1
      %p168 = por %p166, %p167
      %p169 = scmp.ne.s32.totalorder %s161, %s164
      %p170 = scmp.eq.s32.totalorder %s23, 0
      %p171 = por %p169, %p170
      %p172 = scmp.ne.s32.totalorder %s161, %s164
      %p173 = scmp.eq.s32.totalorder %s28, 1
      %p174 = por %p172, %p173
      %p175 = scmp.ne.s32.totalorder %s164, %s165
      %p176 = scmp.eq.s32.totalorder %s28, 0
      %p177 = por %p175, %p176
      %p178 = scmp.ne.s32.totalorder %s164, %s165
      %p179 = scmp.eq.s32.totalorder %s29, 1
      %p180 = por %p178, %p179
      %p182 = scmp.ne.s32.totalorder %s165, %s181
      %p183 = scmp.eq.s32.totalorder %s29, 0
      %p184 = por %p182, %p183
      %p185 = scmp.le.s32.totalorder 1, %s23
      %p186 = scmp.lt.s32.totalorder %s23, 3
      %p187 = pnand %p185, %p186
      %p188 = pneg %p187
      // Predicated region
      $region9: #{tpu_custom_call.1} parent=5 // pred_check
        _
      $region10: #{tpu_custom_call.1} parent=5 // pred_check_branch
        %190 = sbr.rel (%p187) target = $region12
      $region11: #{tpu_custom_call.1} parent=5 // pred_region
        %s191 = ssub.s32 %s23, 1
      $region12: #{tpu_custom_call.1} parent=5 // pred_fallthru
        _
      %p192 = scmp.lt.s32.totalorder %s23, 2
      // Predicated region
      $region13: #{tpu_custom_call.1} parent=5 // pred_check
        %p193 = pneg %p192
      $region14: #{tpu_custom_call.1} parent=5 // pred_check_branch
        %195 = sbr.rel (%p193) target = $region16
      $region15: #{tpu_custom_call.1} parent=5 // pred_region
        // Predicated region
        $region17: #{tpu_custom_call.1} parent=15 // pred_check
          %p196 = pneg %p61
        $region18: #{tpu_custom_call.1} parent=15 // pred_check_branch
          %198 = sbr.rel (%p196) target = $region20
        $region19: #{tpu_custom_call.1} parent=15 // pred_region
          %s199 = sand.u32 %s51, 1
          %s200 = scalar_lea.sflag [#allocation3], %s199
          %s201 = sand.u32 %s51, 1
          %s202 = smul.addr %s201, 16
          %s203 = scalar_lea.vmem [#allocation2], %s202
          %s204 = sadd.s32 %s30, %s31
          %p205 = scmp.lt.s32.totalorder %s204, 0
          %s206 = scalar_select %p205, %s204, 0
          %s207 = smul.u32 2, %s206
          %s209 = ssub.s32 256, 256
          %210 = vsyncadd %s200, %s209
          %s211 = smul.addr %s207, 128
          %s212 = scalar_lea.hbm %s0, %s211
          %s213 = sshll.u32 %s203, 4
          %s214 = int_to_ptr.vmem [resolvable:$true] %s213
          %219 = dma.hbm_to_vmem [thread:$0]  %s212, 256, %s214, %s200, 128, 128, 8
        $region20: #{tpu_custom_call.1} parent=15 // pred_fallthru
          _
        // Predicated region
        $region21: #{tpu_custom_call.1} parent=15 // pred_check
          %p220 = pneg %p93
        $region22: #{tpu_custom_call.1} parent=15 // pred_check_branch
          %222 = sbr.rel (%p220) target = $region24
        $region23: #{tpu_custom_call.1} parent=15 // pred_region
          %s223 = sand.u32 %s83, 1
          %s224 = scalar_lea.sflag [#allocation6], %s223
          %s225 = sand.u32 %s83, 1
          %s226 = smul.addr %s225, 16
          %s227 = scalar_lea.vmem [#allocation5], %s226
          %s228 = sadd.s32 %s30, %s31
          %p229 = scmp.lt.s32.totalorder %s228, 0
          %s230 = scalar_select %p229, %s228, 0
          %s231 = smul.u32 2, %s230
          %s233 = ssub.s32 256, 256
          %234 = vsyncadd %s224, %s233
          %s235 = smul.addr %s231, 128
          %s236 = scalar_lea.hbm %s1, %s235
          %s237 = sshll.u32 %s227, 4
          %s238 = int_to_ptr.vmem [resolvable:$true] %s237
          %243 = dma.hbm_to_vmem [thread:$0]  %s236, 256, %s238, %s224, 128, 128, 8
        $region24: #{tpu_custom_call.1} parent=15 // pred_fallthru
          _
      $region16: #{tpu_custom_call.1} parent=5 // pred_fallthru
        _
      %p244 = scmp.le.s32.totalorder 1, %s23
      %p245 = scmp.lt.s32.totalorder %s23, 3
      %p246 = pnand %p244, %p245
      %p247 = pneg %p246
      // Predicated region
      $region25: #{tpu_custom_call.1} parent=5 // pred_check
        _
      $region26: #{tpu_custom_call.1} parent=5 // pred_check_branch
        %249 = sbr.rel (%p246) target = $region28
      $region27: #{tpu_custom_call.1} parent=5 // pred_region
        %s250 = ssub.s32 %s23, 1
        %s251 = sand.u32 %s54, 1
        %s252 = scalar_lea.sflag [#allocation3], %s251
        %s253 = sand.u32 %s54, 1
        %s254 = smul.addr %s253, 16
        %s255 = scalar_lea.vmem [#allocation2], %s254
        // Predicated region
        $region29: #{tpu_custom_call.1} parent=27 // pred_check
          %p256 = pneg %p67
        $region30: #{tpu_custom_call.1} parent=27 // pred_check_branch
          %258 = sbr.rel (%p256) target = $region32
        $region31: #{tpu_custom_call.1} parent=27 // pred_region
          %259 = dma.done %s252, 256
        $region32: #{tpu_custom_call.1} parent=27 // pred_fallthru
          _
        %s260 = sand.u32 %s86, 1
        %s261 = scalar_lea.sflag [#allocation6], %s260
        %s262 = sand.u32 %s86, 1
        %s263 = smul.addr %s262, 16
        %s264 = scalar_lea.vmem [#allocation5], %s263
        // Predicated region
        $region33: #{tpu_custom_call.1} parent=27 // pred_check
          %p265 = pneg %p99
        $region34: #{tpu_custom_call.1} parent=27 // pred_check_branch
          %267 = sbr.rel (%p265) target = $region36
        $region35: #{tpu_custom_call.1} parent=27 // pred_region
          %268 = dma.done %s261, 256
        $region36: #{tpu_custom_call.1} parent=27 // pred_fallthru
          _
        %s269 = sand.u32 %s54, 1
        %s270 = scalar_lea.sflag [#allocation3], %s269
        %s271 = sand.u32 %s54, 1
        %s272 = smul.addr %s271, 16
        %s273 = scalar_lea.vmem [#allocation2], %s272
        %p274 = pneg %p67
        %p275 = pneg %p64
        %s276 = sand.u32 %s86, 1
        %s277 = scalar_lea.sflag [#allocation6], %s276
        %s278 = sand.u32 %s86, 1
        %s279 = smul.addr %s278, 16
        %s280 = scalar_lea.vmem [#allocation5], %s279
        %p281 = pneg %p99
        %p282 = pneg %p96
        %p283 = pneg %p125
        %p284 = pneg %p122
        %s285 = sand.u32 %s112, 1
        %s286 = scalar_lea.sflag [#allocation4], %s285
        %s287 = sand.u32 %s112, 1
        %s288 = smul.addr %s287, 8
        %s289 = scalar_lea.vmem [#allocation7], %s288
        %p290 = pneg %p151
        %p291 = pneg %p148
        %s292 = sand.u32 %s28, 1
        %s293 = scalar_lea.sflag [#allocation9], %s292
        %s294 = sand.u32 %s138, 1
        %s295 = smul.addr %s294, 8
        %s296 = scalar_lea.vmem [#allocation8], %s295
        %p297 = pneg %p177
        %p298 = pneg %p174
        %s299 = sand.u32 %s28, 1
        %s300 = scalar_lea.sflag [#allocation9], %s299
        %s301 = sand.u32 %s164, 1
        %s302 = smul.addr %s301, 8
        %s303 = scalar_lea.vmem [#allocation10], %s302
        %s304 = sadd.s32 %s32, %s33
        %p305 = scmp.lt.s32.totalorder %s304, 0
        %s306 = scalar_select %p305, %s304, 0
        %s307 = smul.u32 2, %s306
        %s308 = sadd.s32 %s32, %s33
        %p309 = scmp.lt.s32.totalorder %s308, 0
        %s310 = scalar_select %p309, %s308, 0
        %s311 = smul.u32 2, %s310
        %p312 = scmp.eq.s32.totalorder %s33, 0
        // Predicated region
        $region37: #{tpu_custom_call.1} parent=27 // pred_check
          %p313 = pneg %p312
        $region38: #{tpu_custom_call.1} parent=27 // pred_check_branch
          %315 = sbr.rel (%p313) target = $region40
        $region39: #{tpu_custom_call.1} parent=27 // pred_region
          %316 = vst [vmem:[%s289] sm:$0xff] 0.0
          %317 = vst [vmem:[%s296] sm:$0xff] 0.0
          %318 = vst [vmem:[%s303] sm:$0xff] 0.0
        $region40: #{tpu_custom_call.1} parent=27 // pred_fallthru
          _
        %s319 = sadd.s32 %s32, %s33
        %p320 = scmp.lt.s32.totalorder %s319, 1
        // Predicated region
        $region41: #{tpu_custom_call.1} parent=27 // pred_check
          %p321 = pneg %p320
        $region42: #{tpu_custom_call.1} parent=27 // pred_check_branch
          %323 = sbr.rel (%p321) target = $region44
        $region43: #{tpu_custom_call.1} parent=27 // pred_region
          %v324 = vld [vmem:[%s255] sm:$0xff]
          %v325 = vld [vmem:[%s255 + $0x8] sm:$0xff]
          %v326 = vld [vmem:[%s264] sm:$0xff]
          %v327 = vld [vmem:[%s264 + $0x8] sm:$0xff]
          %v328 = vand.u32 2147483647, %v324
          %v329 = vand.u32 2147483647, %v325
          %v330 = vsub.f32 0.0, %v328
          %v331 = vsub.f32 0.0, %v329
          %v332 = vmul.f32 %v330, 1.442695
          %v333 = vpow.pop %v332
          %v334 = vmul.f32 %v331, 1.442695
          %v335 = vpow.pop %v334
          %v336 = vadd.f32 %v333, 1.0
          %v337 = vadd.f32 %v335, 1.0
          %v338 = vmax.f32 %v324, 0.0
          %v339 = vmax.f32 %v325, 0.0
          %v340 = vmul.f32 %v324, %v326
          %v341 = vmul.f32 %v325, %v327
          %v342 = vsub.f32 %v338, %v340
          %v343 = vsub.f32 %v339, %v341
          %v344 = vlog2.pop %v336
          %v345 = vmul.f32 %v344, 0.6931472
          %v346 = vlog2.pop %v337
          %v347 = vmul.f32 %v346, 0.6931472
          %v348 = vadd.f32 %v342, %v345
          %v349 = vadd.f32 %v343, %v347
          %v350 = vrcp.pop %v336
          %v351 = vrcp.pop %v337
          %vm352 = vcmp.ge.f32.partialorder %v324, 0.0
          %vm353 = vcmp.ge.f32.partialorder %v325, 0.0
          %v354 = vmul.f32 %v333, %v350
          %v355 = vmul.f32 %v335, %v351
          %v356 = vsel %vm352, %v350, %v354
          %v357 = vsel %vm353, %v351, %v355
          %v358 = vmul.f32 %v356, %v326
          %v359 = vmul.f32 %v357, %v327
          %v360 = vadd.f32 %v356, %v326
          %v361 = vadd.f32 %v357, %v327
          %v362 = vld [vmem:[%s289] sm:$0xff]
          %v363 = vadd.f32 %v348, %v349
          %v364 = vadd.f32 %v362, %v363
          %365 = vst [vmem:[%s289] sm:$0xff] %v364
          %v366 = vld [vmem:[%s296] sm:$0xff]
          %v367 = vadd.f32 %v358, %v359
          %v368 = vadd.f32 %v366, %v367
          %369 = vst [vmem:[%s296] sm:$0xff] %v368
          %v370 = vld [vmem:[%s303] sm:$0xff]
          %v371 = vadd.f32 %v360, %v361
          %v372 = vadd.f32 %v370, %v371
          %373 = vst [vmem:[%s303] sm:$0xff] %v372
        $region44: #{tpu_custom_call.1} parent=27 // pred_fallthru
          _
        %s374 = sand.u32 %s112, 1
        %s375 = scalar_lea.sflag [#allocation4], %s374
        %s376 = sand.u32 %s112, 1
        %s377 = smul.addr %s376, 8
        %s378 = scalar_lea.vmem [#allocation7], %s377
        %s379 = sand.u32 %s28, 1
        %s380 = scalar_lea.sflag [#allocation9], %s379
        %s381 = sand.u32 %s138, 1
        %s382 = smul.addr %s381, 8
        %s383 = scalar_lea.vmem [#allocation8], %s382
        %s384 = sand.u32 %s28, 1
        %s385 = scalar_lea.sflag [#allocation9], %s384
        %s386 = sand.u32 %s164, 1
        %s387 = smul.addr %s386, 8
        %s388 = scalar_lea.vmem [#allocation10], %s387
        // Predicated region
        $region45: #{tpu_custom_call.1} parent=27 // pred_check
          %p389 = pneg %p122
        $region46: #{tpu_custom_call.1} parent=27 // pred_check_branch
          %391 = sbr.rel (%p389) target = $region48
        $region47: #{tpu_custom_call.1} parent=27 // pred_region
          %s393 = ssub.s32 128, 128
          %394 = vsyncadd %s375, %s393
          %s395 = smul.addr %s32, 128
          %s396 = scalar_lea.hbm %s2, %s395
          %s398 = sshll.u32 %s378, 4
          %s399 = int_to_ptr.vmem [resolvable:$true] %s398
          %401 = dma.vmem_to_hbm [thread:$0]  %s399, 128, %s396, %s375
        $region48: #{tpu_custom_call.1} parent=27 // pred_fallthru
          _
        // Predicated region
        $region49: #{tpu_custom_call.1} parent=27 // pred_check
          %p402 = pneg %p148
        $region50: #{tpu_custom_call.1} parent=27 // pred_check_branch
          %404 = sbr.rel (%p402) target = $region52
        $region51: #{tpu_custom_call.1} parent=27 // pred_region
          %s406 = ssub.s32 128, 128
          %407 = vsyncadd %s380, %s406
          %s408 = smul.addr %s32, 128
          %s409 = scalar_lea.hbm %s3, %s408
          %s411 = sshll.u32 %s383, 4
          %s412 = int_to_ptr.vmem [resolvable:$true] %s411
          %414 = dma.vmem_to_hbm [thread:$0]  %s412, 128, %s409, %s380
        $region52: #{tpu_custom_call.1} parent=27 // pred_fallthru
          _
        // Predicated region
        $region53: #{tpu_custom_call.1} parent=27 // pred_check
          %p415 = pneg %p174
        $region54: #{tpu_custom_call.1} parent=27 // pred_check_branch
          %417 = sbr.rel (%p415) target = $region56
        $region55: #{tpu_custom_call.1} parent=27 // pred_region
          %s419 = ssub.s32 128, 128
          %420 = vsyncadd %s385, %s419
          %s421 = smul.addr %s32, 128
          %s422 = scalar_lea.hbm %s4, %s421
          %s424 = sshll.u32 %s388, 4
          %s425 = int_to_ptr.vmem [resolvable:$true] %s424
          %427 = dma.vmem_to_hbm [thread:$0]  %s425, 128, %s422, %s385
        $region56: #{tpu_custom_call.1} parent=27 // pred_fallthru
          _
      $region28: #{tpu_custom_call.1} parent=5 // pred_fallthru
        _
      %p428 = scmp.le.s32.totalorder 2, %s23
      // Predicated region
      $region57: #{tpu_custom_call.1} parent=5 // pred_check
        %p429 = pneg %p428
      $region58: #{tpu_custom_call.1} parent=5 // pred_check_branch
        %431 = sbr.rel (%p429) target = $region60
      $region59: #{tpu_custom_call.1} parent=5 // pred_region
        %s432 = ssub.s32 %s23, 2
        // Predicated region
        $region61: #{tpu_custom_call.1} parent=59 // pred_check
          %p433 = pneg %p128
        $region62: #{tpu_custom_call.1} parent=59 // pred_check_branch
          %435 = sbr.rel (%p433) target = $region64
        $region63: #{tpu_custom_call.1} parent=59 // pred_region
          %s436 = sand.u32 %s113, 1
          %s437 = scalar_lea.sflag [#allocation4], %s436
          %s438 = sand.u32 %s113, 1
          %s439 = smul.addr %s438, 8
          %s440 = scalar_lea.vmem [#allocation7], %s439
          %441 = dma.done %s437, 128
        $region64: #{tpu_custom_call.1} parent=59 // pred_fallthru
          _
        // Predicated region
        $region65: #{tpu_custom_call.1} parent=59 // pred_check
          %p442 = pneg %p154
        $region66: #{tpu_custom_call.1} parent=59 // pred_check_branch
          %444 = sbr.rel (%p442) target = $region68
        $region67: #{tpu_custom_call.1} parent=59 // pred_region
          %s445 = sand.u32 %s29, 1
          %s446 = scalar_lea.sflag [#allocation9], %s445
          %s447 = sand.u32 %s139, 1
          %s448 = smul.addr %s447, 8
          %s449 = scalar_lea.vmem [#allocation8], %s448
          %450 = dma.done %s446, 128
        $region68: #{tpu_custom_call.1} parent=59 // pred_fallthru
          _
        // Predicated region
        $region69: #{tpu_custom_call.1} parent=59 // pred_check
          %p451 = pneg %p180
        $region70: #{tpu_custom_call.1} parent=59 // pred_check_branch
          %453 = sbr.rel (%p451) target = $region72
        $region71: #{tpu_custom_call.1} parent=59 // pred_region
          %s454 = sand.u32 %s29, 1
          %s455 = scalar_lea.sflag [#allocation9], %s454
          %s456 = sand.u32 %s165, 1
          %s457 = smul.addr %s456, 8
          %s458 = scalar_lea.vmem [#allocation10], %s457
          %459 = dma.done %s455, 128
        $region72: #{tpu_custom_call.1} parent=59 // pred_fallthru
          _
      $region60: #{tpu_custom_call.1} parent=5 // pred_fallthru
        _
    $region6: #{tpu_custom_call.1} parent=1 // loop_footer
      %s27 = sadd.s32 1, %s23
    $region7: #{tpu_custom_call.1} parent=1 // loop_footer_branch
      %22 = sbr.rel target = $region3
    $region8: #{tpu_custom_call.1} parent=1 // loop_exit
      _
    %460 = vsyncpa [#allocation3], 1
    %s461 = scalar_lea.sflag [#allocation3], 1
    %462 = vsyncpa %s461, 1
    %463 = vsyncpa [#allocation6], 1
    %s464 = scalar_lea.sflag [#allocation6], 1
    %465 = vsyncpa %s464, 1
    %466 = vsyncpa [#allocation4], 1
    %s467 = scalar_lea.sflag [#allocation4], 1
    %468 = vsyncpa %s467, 1
    %469 = vsyncpa [#allocation9], 1
    %s470 = scalar_lea.sflag [#allocation9], 1
    %471 = vsyncpa %s470, 1

</llo_original>
